<compile_context>
chip_gen: v7x
topology: tpu7x:2x2x1
jax: 0.10.0
libtpu: 0.0.40
codegen_flags: <defaults>
</compile_context>

<pallas_src>
import functools

import jax
import jax.numpy as jnp
import numpy as np
from jax.experimental import pallas as pl
from jax.experimental.pallas import tpu as pltpu


def _round_up(x, m):
    return (x + m - 1) // m * m


def anticipation_mae_kernel(
    o_ref, t_ref,                         # inputs  (NC, tile_t) f32
    w_ref, in_ref, p_ref, e_ref,          # outputs (1, 1) f32
    so_ref, co_ref, si_ref, ci_ref,       # scratch accumulators (NC, 1) f32
    sp_ref, cp_ref, se_ref, ce_ref,
    *, h,
):
    j = pl.program_id(0)

    @pl.when(j == 0)
    def _init():
        for r in (so_ref, co_ref, si_ref, ci_ref, sp_ref, cp_ref, se_ref, ce_ref):
            r[...] = jnp.zeros_like(r)

    o = o_ref[...]                        # (NC, tile_t)
    t = t_ref[...]

    # tmp_target = where(target > h or target < 0, h, target)
    tc = jnp.where((t > h) | (t < 0.0), jnp.float32(h), t)
    diff = jnp.abs(o - tc)

    mask_o = tc == h                              # cond_oMAE
    mask_in = (tc < h) & (tc > 0.0)               # cond_inMAE
    mask_p = (o < 0.9 * h) & (o > 0.1 * h)        # cond_pMAE (on the prediction)
    mask_e = (tc < 0.1 * h) & (tc > 0.0)          # cond_eMAE

    def sum_cnt(mask):
        m = mask.astype(jnp.float32)
        s = jnp.sum(diff * m, axis=-1, keepdims=True)   # (NC, 1) lane-reduce
        c = jnp.sum(m, axis=-1, keepdims=True)           # (NC, 1)
        return s, c

    so, co = sum_cnt(mask_o)
    si, ci = sum_cnt(mask_in)
    sp, cp = sum_cnt(mask_p)
    se, ce = sum_cnt(mask_e)

    so_ref[...] += so; co_ref[...] += co
    si_ref[...] += si; ci_ref[...] += ci
    sp_ref[...] += sp; cp_ref[...] += cp
    se_ref[...] += se; ce_ref[...] += ce

    @pl.when(j == pl.num_programs(0) - 1)
    def _finalize():
        nan = jnp.float32(jnp.nan)

        def masked_mean(s_ref, c_ref):
            s = s_ref[...]
            c = c_ref[...]
            return jnp.where(c > 0, s / c, nan)           # (NC, 1)

        mo = masked_mean(so_ref, co_ref)
        mi = masked_mean(si_ref, ci_ref)
        mp = masked_mean(sp_ref, cp_ref)
        me = masked_mean(se_ref, ce_ref)

        # per-(n,c) wMAE = nanmean([mean_oMAE, mean_inMAE])
        o_nan = jnp.isnan(mo)
        i_nan = jnp.isnan(mi)
        w = jnp.where(
            o_nan & i_nan, nan,
            jnp.where(o_nan, mi, jnp.where(i_nan, mo, 0.5 * (mo + mi))))

        def nanmean_rows(x):                              # (NC, 1) -> (1, 1)
            valid = jnp.logical_not(jnp.isnan(x))
            cnt = jnp.sum(valid.astype(jnp.float32), axis=(0, 1), keepdims=True)
            s = jnp.sum(jnp.where(valid, x, 0.0), axis=(0, 1), keepdims=True)
            return jnp.where(cnt > 0, s / cnt, nan)

        w_ref[...] = nanmean_rows(w)
        in_ref[...] = nanmean_rows(mi)
        p_ref[...] = nanmean_rows(mp)
        e_ref[...] = nanmean_rows(me)


@functools.partial(jax.jit, static_argnames=("h",))
def anticipation_mae(output_rsd, target_rsd, h=7500.0):
    assert output_rsd.shape == target_rsd.shape and output_rsd.ndim == 3
    N, T, C = output_rsd.shape
    NC = N * C

    # Lane-dense layout: (N, T, C) -> (N*C, T).  T (reduction axis) on lanes.
    o2 = jnp.transpose(output_rsd.astype(jnp.float32), (0, 2, 1)).reshape(NC, T)
    t2 = jnp.transpose(target_rsd.astype(jnp.float32), (0, 2, 1)).reshape(NC, T)

    # Pick a time tile: multiple of 128, capped so double-buffered inputs stay
    # well under the VMEM budget even for large NC.
    budget = 8 * 1024 * 1024                       # bytes for input double-buffers
    per_col = NC * 4 * 2 * 2                       # f32 * 2 inputs * 2 buffers
    tile_cap = max(128, (budget // per_col) // 128 * 128)
    tile_t = min(2048, tile_cap, _round_up(T, 128))

    # Zero-pad T to a multiple of the tile: zeros satisfy none of the masks
    # (tc = 0 and output = 0 for h > 0), so padding never contributes.
    t_pad = _round_up(T, tile_t)
    if t_pad != T:
        pad = t_pad - T
        o2 = jnp.pad(o2, ((0, 0), (0, pad)))
        t2 = jnp.pad(t2, ((0, 0), (0, pad)))
    num_t = t_pad // tile_t

    kernel = functools.partial(anticipation_mae_kernel, h=float(h))

    grid_spec = pltpu.PrefetchScalarGridSpec(
        num_scalar_prefetch=0,
        grid=(num_t,),
        in_specs=[
            pl.BlockSpec((NC, tile_t), lambda j: (0, j)),
            pl.BlockSpec((NC, tile_t), lambda j: (0, j)),
        ],
        out_specs=[pl.BlockSpec((1, 1), lambda j: (0, 0))] * 4,
        scratch_shapes=[pltpu.VMEM((NC, 1), jnp.float32)] * 8,
    )

    outs = pl.pallas_call(
        kernel,
        out_shape=[jax.ShapeDtypeStruct((1, 1), jnp.float32)] * 4,
        grid_spec=grid_spec,
        compiler_params=pltpu.CompilerParams(
            dimension_semantics=("arbitrary",),   # accumulation across T tiles
            vmem_limit_bytes=64 * 1024 * 1024,
        ),
    )(o2, t2)

    wMAE, inMAE, pMAE, eMAE = (o[0, 0] for o in outs)
    return wMAE, inMAE, pMAE, eMAE


def _reference_numpy(output_rsd, target_rsd, h):
    """Direct transcription of the PyTorch forward for verification."""
    out = np.asarray(output_rsd, dtype=np.float64)
    tgt = np.asarray(target_rsd, dtype=np.float64)
    N, _, C = out.shape
    wl, il, plist, el = [], [], [], []
    for n in range(N):
        for c in range(C):
            o = out[n, :, c]
            t = tgt[n, :, c]
            t = np.where((t > h) | (t < 0), h, t)
            d = np.abs(o - t)

            def mm(mask):
                return float(np.mean(d[mask])) if mask.any() else float("nan")

            mo = mm(t == h)
            mi = mm((t < h) & (t > 0))
            mp = mm((o < 0.9 * h) & (o > 0.1 * h))
            me = mm((t < 0.1 * h) & (t > 0))
            pair = [v for v in (mo, mi) if not np.isnan(v)]
            w = float(np.mean(pair)) if pair else float("nan")
            wl.append(w); il.append(mi); plist.append(mp); el.append(me)

    def nm(xs):
        xs = np.asarray(xs)
        m = ~np.isnan(xs)
        return float(xs[m].mean()) if m.any() else float("nan")

    return nm(wl), nm(il), nm(plist), nm(el)


def _check(N, T, C, h, key):
    k1, k2 = jax.random.split(key)
    # values spanning <0, (0, h), ==h (after clamp) and >h regions
    output_rsd = jax.random.uniform(k1, (N, T, C), jnp.float32, -0.2 * h, 1.2 * h)
    target_rsd = jax.random.uniform(k2, (N, T, C), jnp.float32, -0.2 * h, 1.2 * h)

    result = anticipation_mae(output_rsd, target_rsd, h=h)
    result = jax.block_until_ready(result)

    ref = _reference_numpy(output_rsd, target_rsd, h)
    got = np.array([float(r) for r in result])
    exp = np.array(ref)
    np.testing.assert_allclose(got, exp, rtol=1e-4, atol=1e-4 * h, equal_nan=True)


if __name__ == "__main__":
    key = jax.random.PRNGKey(0)
    k1, k2 = jax.random.split(key)

    # small shape consistent with the module (batch=2, time=16, channels=4)
    _check(N=2, T=16, C=4, h=100.0, key=k1)
    # larger time axis to exercise the multi-tile grid + accumulator path
    _check(N=2, T=5000, C=3, h=7500.0, key=k2)

    print("KERNEL_OK")
</pallas_src>

<mosaic_0001>
module attributes {stable_mosaic.version = 11 : i64} {
  func.func @anticipation_mae_kernel(%arg0: i32, %arg1: memref<8x128xf32, #tpu.memory_space<vmem>>, %arg2: memref<8x128xf32, #tpu.memory_space<vmem>>, %arg3: memref<1x1xf32, #tpu.memory_space<vmem>>, %arg4: memref<1x1xf32, #tpu.memory_space<vmem>>, %arg5: memref<1x1xf32, #tpu.memory_space<vmem>>, %arg6: memref<1x1xf32, #tpu.memory_space<vmem>>, %arg7: memref<8x1xf32, #tpu.memory_space<vmem>>, %arg8: memref<8x1xf32, #tpu.memory_space<vmem>>, %arg9: memref<8x1xf32, #tpu.memory_space<vmem>>, %arg10: memref<8x1xf32, #tpu.memory_space<vmem>>, %arg11: memref<8x1xf32, #tpu.memory_space<vmem>>, %arg12: memref<8x1xf32, #tpu.memory_space<vmem>>, %arg13: memref<8x1xf32, #tpu.memory_space<vmem>>, %arg14: memref<8x1xf32, #tpu.memory_space<vmem>>) attributes {dimension_semantics = [#tpu.dimension_semantics<arbitrary>], iteration_bounds = array<i64: 1>, scalar_prefetch = 0 : i64, scratch_operands = 8 : i64, tpu.core_type = #tpu.core_type<tc>, window_params = [{transform_indices = @transform_0, window_bounds = array<i64: 8, 128>}, {transform_indices = @transform_1, window_bounds = array<i64: 8, 128>}, {pipeline_mode = #tpu.pipeline_mode<synchronous>, transform_indices = @transform_2, window_bounds = array<i64: 1, 1>}, {pipeline_mode = #tpu.pipeline_mode<synchronous>, transform_indices = @transform_3, window_bounds = array<i64: 1, 1>}, {pipeline_mode = #tpu.pipeline_mode<synchronous>, transform_indices = @transform_4, window_bounds = array<i64: 1, 1>}, {pipeline_mode = #tpu.pipeline_mode<synchronous>, transform_indices = @transform_5, window_bounds = array<i64: 1, 1>}]} {
    %c0_i32 = arith.constant 0 : i32
    %0 = arith.cmpi eq, %arg0, %c0_i32 : i32
    %1 = arith.extui %0 : i1 to i32
    %c0_i32_0 = arith.constant 0 : i32
    %2 = arith.cmpi ne, %1, %c0_i32_0 : i32
    scf.if %2 {
      %cst_55 = arith.constant 0.000000e+00 : f32
      %86 = vector.broadcast %cst_55 : f32 to vector<8x1xf32>
      %c0_56 = arith.constant 0 : index
      %c0_57 = arith.constant 0 : index
      %87 = vector.load %arg7[%c0_56, %c0_57] : memref<8x1xf32, #tpu.memory_space<vmem>>, vector<8x1xf32>
      tpu.vector_store %arg7[%c0_56, %c0_57], %86 {strides = array<i32>} : memref<8x1xf32, #tpu.memory_space<vmem>>, vector<8x1xf32>,
      %cst_58 = arith.constant 0.000000e+00 : f32
      %88 = vector.broadcast %cst_58 : f32 to vector<8x1xf32>
      %c0_59 = arith.constant 0 : index
      %c0_60 = arith.constant 0 : index
      %89 = vector.load %arg8[%c0_59, %c0_60] : memref<8x1xf32, #tpu.memory_space<vmem>>, vector<8x1xf32>
      tpu.vector_store %arg8[%c0_59, %c0_60], %88 {strides = array<i32>} : memref<8x1xf32, #tpu.memory_space<vmem>>, vector<8x1xf32>,
      %cst_61 = arith.constant 0.000000e+00 : f32
      %90 = vector.broadcast %cst_61 : f32 to vector<8x1xf32>
      %c0_62 = arith.constant 0 : index
      %c0_63 = arith.constant 0 : index
      %91 = vector.load %arg9[%c0_62, %c0_63] : memref<8x1xf32, #tpu.memory_space<vmem>>, vector<8x1xf32>
      tpu.vector_store %arg9[%c0_62, %c0_63], %90 {strides = array<i32>} : memref<8x1xf32, #tpu.memory_space<vmem>>, vector<8x1xf32>,
      %cst_64 = arith.constant 0.000000e+00 : f32
      %92 = vector.broadcast %cst_64 : f32 to vector<8x1xf32>
      %c0_65 = arith.constant 0 : index
      %c0_66 = arith.constant 0 : index
      %93 = vector.load %arg10[%c0_65, %c0_66] : memref<8x1xf32, #tpu.memory_space<vmem>>, vector<8x1xf32>
      tpu.vector_store %arg10[%c0_65, %c0_66], %92 {strides = array<i32>} : memref<8x1xf32, #tpu.memory_space<vmem>>, vector<8x1xf32>,
      %cst_67 = arith.constant 0.000000e+00 : f32
      %94 = vector.broadcast %cst_67 : f32 to vector<8x1xf32>
      %c0_68 = arith.constant 0 : index
      %c0_69 = arith.constant 0 : index
      %95 = vector.load %arg11[%c0_68, %c0_69] : memref<8x1xf32, #tpu.memory_space<vmem>>, vector<8x1xf32>
      tpu.vector_store %arg11[%c0_68, %c0_69], %94 {strides = array<i32>} : memref<8x1xf32, #tpu.memory_space<vmem>>, vector<8x1xf32>,
      %cst_70 = arith.constant 0.000000e+00 : f32
      %96 = vector.broadcast %cst_70 : f32 to vector<8x1xf32>
      %c0_71 = arith.constant 0 : index
      %c0_72 = arith.constant 0 : index
      %97 = vector.load %arg12[%c0_71, %c0_72] : memref<8x1xf32, #tpu.memory_space<vmem>>, vector<8x1xf32>
      tpu.vector_store %arg12[%c0_71, %c0_72], %96 {strides = array<i32>} : memref<8x1xf32, #tpu.memory_space<vmem>>, vector<8x1xf32>,
      %cst_73 = arith.constant 0.000000e+00 : f32
      %98 = vector.broadcast %cst_73 : f32 to vector<8x1xf32>
      %c0_74 = arith.constant 0 : index
      %c0_75 = arith.constant 0 : index
      %99 = vector.load %arg13[%c0_74, %c0_75] : memref<8x1xf32, #tpu.memory_space<vmem>>, vector<8x1xf32>
      tpu.vector_store %arg13[%c0_74, %c0_75], %98 {strides = array<i32>} : memref<8x1xf32, #tpu.memory_space<vmem>>, vector<8x1xf32>,
      %cst_76 = arith.constant 0.000000e+00 : f32
      %100 = vector.broadcast %cst_76 : f32 to vector<8x1xf32>
      %c0_77 = arith.constant 0 : index
      %c0_78 = arith.constant 0 : index
      %101 = vector.load %arg14[%c0_77, %c0_78] : memref<8x1xf32, #tpu.memory_space<vmem>>, vector<8x1xf32>
      tpu.vector_store %arg14[%c0_77, %c0_78], %100 {strides = array<i32>} : memref<8x1xf32, #tpu.memory_space<vmem>>, vector<8x1xf32>,
    } else {
    }
    %c0 = arith.constant 0 : index
    %c0_1 = arith.constant 0 : index
    %3 = vector.load %arg1[%c0, %c0_1] : memref<8x128xf32, #tpu.memory_space<vmem>>, vector<8x128xf32>
    %c0_2 = arith.constant 0 : index
    %c0_3 = arith.constant 0 : index
    %4 = vector.load %arg2[%c0_2, %c0_3] : memref<8x128xf32, #tpu.memory_space<vmem>>, vector<8x128xf32>
    %cst = arith.constant 1.000000e+02 : f32
    %5 = vector.broadcast %cst : f32 to vector<8x128xf32>
    %6 = arith.cmpf ogt, %4, %5 : vector<8x128xf32>
    %cst_4 = arith.constant 0.000000e+00 : f32
    %7 = vector.broadcast %cst_4 : f32 to vector<8x128xf32>
    %8 = arith.cmpf olt, %4, %7 : vector<8x128xf32>
    %9 = arith.ori %6, %8 : vector<8x128xi1>
    %cst_5 = arith.constant 1.000000e+02 : f32
    %10 = vector.broadcast %cst_5 : f32 to vector<8x128xf32>
    %11 = arith.select %9, %10, %4 : vector<8x128xi1>, vector<8x128xf32>
    %12 = arith.subf %3, %11 : vector<8x128xf32>
    %13 = math.absf %12 : vector<8x128xf32>
    %cst_6 = arith.constant 1.000000e+02 : f32
    %14 = vector.broadcast %cst_6 : f32 to vector<8x128xf32>
    %15 = arith.cmpf oeq, %11, %14 : vector<8x128xf32>
    %cst_7 = arith.constant 1.000000e+02 : f32
    %16 = vector.broadcast %cst_7 : f32 to vector<8x128xf32>
    %17 = arith.cmpf olt, %11, %16 : vector<8x128xf32>
    %cst_8 = arith.constant 0.000000e+00 : f32
    %18 = vector.broadcast %cst_8 : f32 to vector<8x128xf32>
    %19 = arith.cmpf ogt, %11, %18 : vector<8x128xf32>
    %20 = arith.andi %17, %19 : vector<8x128xi1>
    %cst_9 = arith.constant 9.000000e+01 : f32
    %21 = vector.broadcast %cst_9 : f32 to vector<8x128xf32>
    %22 = arith.cmpf olt, %3, %21 : vector<8x128xf32>
    %cst_10 = arith.constant 1.000000e+01 : f32
    %23 = vector.broadcast %cst_10 : f32 to vector<8x128xf32>
    %24 = arith.cmpf ogt, %3, %23 : vector<8x128xf32>
    %25 = arith.andi %22, %24 : vector<8x128xi1>
    %cst_11 = arith.constant 1.000000e+01 : f32
    %26 = vector.broadcast %cst_11 : f32 to vector<8x128xf32>
    %27 = arith.cmpf olt, %11, %26 : vector<8x128xf32>
    %cst_12 = arith.constant 0.000000e+00 : f32
    %28 = vector.broadcast %cst_12 : f32 to vector<8x128xf32>
    %29 = arith.cmpf ogt, %11, %28 : vector<8x128xf32>
    %30 = arith.andi %27, %29 : vector<8x128xi1>
    %31 = arith.extui %15 : vector<8x128xi1> to vector<8x128xi32>
    %32 = arith.sitofp %31 : vector<8x128xi32> to vector<8x128xf32>
    %33 = arith.mulf %13, %32 : vector<8x128xf32>
    %cst_13 = arith.constant dense<0.000000e+00> : vector<8xf32>
    %34 = vector.multi_reduction <add>, %33, %cst_13 [1] : vector<8x128xf32> to vector<8xf32>
    %35 = vector.shape_cast %34 : vector<8xf32> to vector<8x1xf32>
    %cst_14 = arith.constant dense<0.000000e+00> : vector<8xf32>
    %36 = vector.multi_reduction <add>, %32, %cst_14 [1] : vector<8x128xf32> to vector<8xf32>
    %37 = vector.shape_cast %36 : vector<8xf32> to vector<8x1xf32>
    %38 = arith.extui %20 : vector<8x128xi1> to vector<8x128xi32>
    %39 = arith.sitofp %38 : vector<8x128xi32> to vector<8x128xf32>
    %40 = arith.mulf %13, %39 : vector<8x128xf32>
    %cst_15 = arith.constant dense<0.000000e+00> : vector<8xf32>
    %41 = vector.multi_reduction <add>, %40, %cst_15 [1] : vector<8x128xf32> to vector<8xf32>
    %42 = vector.shape_cast %41 : vector<8xf32> to vector<8x1xf32>
    %cst_16 = arith.constant dense<0.000000e+00> : vector<8xf32>
    %43 = vector.multi_reduction <add>, %39, %cst_16 [1] : vector<8x128xf32> to vector<8xf32>
    %44 = vector.shape_cast %43 : vector<8xf32> to vector<8x1xf32>
    %45 = arith.extui %25 : vector<8x128xi1> to vector<8x128xi32>
    %46 = arith.sitofp %45 : vector<8x128xi32> to vector<8x128xf32>
    %47 = arith.mulf %13, %46 : vector<8x128xf32>
    %cst_17 = arith.constant dense<0.000000e+00> : vector<8xf32>
    %48 = vector.multi_reduction <add>, %47, %cst_17 [1] : vector<8x128xf32> to vector<8xf32>
    %49 = vector.shape_cast %48 : vector<8xf32> to vector<8x1xf32>
    %cst_18 = arith.constant dense<0.000000e+00> : vector<8xf32>
    %50 = vector.multi_reduction <add>, %46, %cst_18 [1] : vector<8x128xf32> to vector<8xf32>
    %51 = vector.shape_cast %50 : vector<8xf32> to vector<8x1xf32>
    %52 = arith.extui %30 : vector<8x128xi1> to vector<8x128xi32>
    %53 = arith.sitofp %52 : vector<8x128xi32> to vector<8x128xf32>
    %54 = arith.mulf %13, %53 : vector<8x128xf32>
    %cst_19 = arith.constant dense<0.000000e+00> : vector<8xf32>
    %55 = vector.multi_reduction <add>, %54, %cst_19 [1] : vector<8x128xf32> to vector<8xf32>
    %56 = vector.shape_cast %55 : vector<8xf32> to vector<8x1xf32>
    %cst_20 = arith.constant dense<0.000000e+00> : vector<8xf32>
    %57 = vector.multi_reduction <add>, %53, %cst_20 [1] : vector<8x128xf32> to vector<8xf32>
    %58 = vector.shape_cast %57 : vector<8xf32> to vector<8x1xf32>
    %c0_21 = arith.constant 0 : index
    %c0_22 = arith.constant 0 : index
    %59 = vector.load %arg7[%c0_21, %c0_22] : memref<8x1xf32, #tpu.memory_space<vmem>>, vector<8x1xf32>
    %60 = arith.addf %59, %35 : vector<8x1xf32>
    %c0_23 = arith.constant 0 : index
    %c0_24 = arith.constant 0 : index
    %61 = vector.load %arg7[%c0_23, %c0_24] : memref<8x1xf32, #tpu.memory_space<vmem>>, vector<8x1xf32>
    tpu.vector_store %arg7[%c0_23, %c0_24], %60 {strides = array<i32>} : memref<8x1xf32, #tpu.memory_space<vmem>>, vector<8x1xf32>,
    %c0_25 = arith.constant 0 : index
    %c0_26 = arith.constant 0 : index
    %62 = vector.load %arg8[%c0_25, %c0_26] : memref<8x1xf32, #tpu.memory_space<vmem>>, vector<8x1xf32>
    %63 = arith.addf %62, %37 : vector<8x1xf32>
    %c0_27 = arith.constant 0 : index
    %c0_28 = arith.constant 0 : index
    %64 = vector.load %arg8[%c0_27, %c0_28] : memref<8x1xf32, #tpu.memory_space<vmem>>, vector<8x1xf32>
    tpu.vector_store %arg8[%c0_27, %c0_28], %63 {strides = array<i32>} : memref<8x1xf32, #tpu.memory_space<vmem>>, vector<8x1xf32>,
    %c0_29 = arith.constant 0 : index
    %c0_30 = arith.constant 0 : index
    %65 = vector.load %arg9[%c0_29, %c0_30] : memref<8x1xf32, #tpu.memory_space<vmem>>, vector<8x1xf32>
    %66 = arith.addf %65, %42 : vector<8x1xf32>
    %c0_31 = arith.constant 0 : index
    %c0_32 = arith.constant 0 : index
    %67 = vector.load %arg9[%c0_31, %c0_32] : memref<8x1xf32, #tpu.memory_space<vmem>>, vector<8x1xf32>
    tpu.vector_store %arg9[%c0_31, %c0_32], %66 {strides = array<i32>} : memref<8x1xf32, #tpu.memory_space<vmem>>, vector<8x1xf32>,
    %c0_33 = arith.constant 0 : index
    %c0_34 = arith.constant 0 : index
    %68 = vector.load %arg10[%c0_33, %c0_34] : memref<8x1xf32, #tpu.memory_space<vmem>>, vector<8x1xf32>
    %69 = arith.addf %68, %44 : vector<8x1xf32>
    %c0_35 = arith.constant 0 : index
    %c0_36 = arith.constant 0 : index
    %70 = vector.load %arg10[%c0_35, %c0_36] : memref<8x1xf32, #tpu.memory_space<vmem>>, vector<8x1xf32>
    tpu.vector_store %arg10[%c0_35, %c0_36], %69 {strides = array<i32>} : memref<8x1xf32, #tpu.memory_space<vmem>>, vector<8x1xf32>,
    %c0_37 = arith.constant 0 : index
    %c0_38 = arith.constant 0 : index
    %71 = vector.load %arg11[%c0_37, %c0_38] : memref<8x1xf32, #tpu.memory_space<vmem>>, vector<8x1xf32>
    %72 = arith.addf %71, %49 : vector<8x1xf32>
    %c0_39 = arith.constant 0 : index
    %c0_40 = arith.constant 0 : index
    %73 = vector.load %arg11[%c0_39, %c0_40] : memref<8x1xf32, #tpu.memory_space<vmem>>, vector<8x1xf32>
    tpu.vector_store %arg11[%c0_39, %c0_40], %72 {strides = array<i32>} : memref<8x1xf32, #tpu.memory_space<vmem>>, vector<8x1xf32>,
    %c0_41 = arith.constant 0 : index
    %c0_42 = arith.constant 0 : index
    %74 = vector.load %arg12[%c0_41, %c0_42] : memref<8x1xf32, #tpu.memory_space<vmem>>, vector<8x1xf32>
    %75 = arith.addf %74, %51 : vector<8x1xf32>
    %c0_43 = arith.constant 0 : index
    %c0_44 = arith.constant 0 : index
    %76 = vector.load %arg12[%c0_43, %c0_44] : memref<8x1xf32, #tpu.memory_space<vmem>>, vector<8x1xf32>
    tpu.vector_store %arg12[%c0_43, %c0_44], %75 {strides = array<i32>} : memref<8x1xf32, #tpu.memory_space<vmem>>, vector<8x1xf32>,
    %c0_45 = arith.constant 0 : index
    %c0_46 = arith.constant 0 : index
    %77 = vector.load %arg13[%c0_45, %c0_46] : memref<8x1xf32, #tpu.memory_space<vmem>>, vector<8x1xf32>
    %78 = arith.addf %77, %56 : vector<8x1xf32>
    %c0_47 = arith.constant 0 : index
    %c0_48 = arith.constant 0 : index
    %79 = vector.load %arg13[%c0_47, %c0_48] : memref<8x1xf32, #tpu.memory_space<vmem>>, vector<8x1xf32>
    tpu.vector_store %arg13[%c0_47, %c0_48], %78 {strides = array<i32>} : memref<8x1xf32, #tpu.memory_space<vmem>>, vector<8x1xf32>,
    %c0_49 = arith.constant 0 : index
    %c0_50 = arith.constant 0 : index
    %80 = vector.load %arg14[%c0_49, %c0_50] : memref<8x1xf32, #tpu.memory_space<vmem>>, vector<8x1xf32>
    %81 = arith.addf %80, %58 : vector<8x1xf32>
    %c0_51 = arith.constant 0 : index
    %c0_52 = arith.constant 0 : index
    %82 = vector.load %arg14[%c0_51, %c0_52] : memref<8x1xf32, #tpu.memory_space<vmem>>, vector<8x1xf32>
    tpu.vector_store %arg14[%c0_51, %c0_52], %81 {strides = array<i32>} : memref<8x1xf32, #tpu.memory_space<vmem>>, vector<8x1xf32>,
    %c0_i32_53 = arith.constant 0 : i32
    %83 = arith.cmpi eq, %arg0, %c0_i32_53 : i32
    %84 = arith.extui %83 : i1 to i32
    %c0_i32_54 = arith.constant 0 : i32
    %85 = arith.cmpi ne, %84, %c0_i32_54 : i32
    scf.if %85 {
      %c0_55 = arith.constant 0 : index
      %c0_56 = arith.constant 0 : index
      %86 = vector.load %arg7[%c0_55, %c0_56] : memref<8x1xf32, #tpu.memory_space<vmem>>, vector<8x1xf32>
      %c0_57 = arith.constant 0 : index
      %c0_58 = arith.constant 0 : index
      %87 = vector.load %arg8[%c0_57, %c0_58] : memref<8x1xf32, #tpu.memory_space<vmem>>, vector<8x1xf32>
      %cst_59 = arith.constant 0.000000e+00 : f32
      %88 = vector.broadcast %cst_59 : f32 to vector<8x1xf32>
      %89 = arith.cmpf ogt, %87, %88 : vector<8x1xf32>
      %90 = arith.divf %86, %87 : vector<8x1xf32>
      %cst_60 = arith.constant 0x7FC00000 : f32
      %91 = vector.broadcast %cst_60 : f32 to vector<8x1xf32>
      %92 = arith.select %89, %90, %91 : vector<8x1xi1>, vector<8x1xf32>
      %c0_61 = arith.constant 0 : index
      %c0_62 = arith.constant 0 : index
      %93 = vector.load %arg9[%c0_61, %c0_62] : memref<8x1xf32, #tpu.memory_space<vmem>>, vector<8x1xf32>
      %c0_63 = arith.constant 0 : index
      %c0_64 = arith.constant 0 : index
      %94 = vector.load %arg10[%c0_63, %c0_64] : memref<8x1xf32, #tpu.memory_space<vmem>>, vector<8x1xf32>
      %cst_65 = arith.constant 0.000000e+00 : f32
      %95 = vector.broadcast %cst_65 : f32 to vector<8x1xf32>
      %96 = arith.cmpf ogt, %94, %95 : vector<8x1xf32>
      %97 = arith.divf %93, %94 : vector<8x1xf32>
      %cst_66 = arith.constant 0x7FC00000 : f32
      %98 = vector.broadcast %cst_66 : f32 to vector<8x1xf32>
      %99 = arith.select %96, %97, %98 : vector<8x1xi1>, vector<8x1xf32>
      %c0_67 = arith.constant 0 : index
      %c0_68 = arith.constant 0 : index
      %100 = vector.load %arg11[%c0_67, %c0_68] : memref<8x1xf32, #tpu.memory_space<vmem>>, vector<8x1xf32>
      %c0_69 = arith.constant 0 : index
      %c0_70 = arith.constant 0 : index
      %101 = vector.load %arg12[%c0_69, %c0_70] : memref<8x1xf32, #tpu.memory_space<vmem>>, vector<8x1xf32>
      %cst_71 = arith.constant 0.000000e+00 : f32
      %102 = vector.broadcast %cst_71 : f32 to vector<8x1xf32>
      %103 = arith.cmpf ogt, %101, %102 : vector<8x1xf32>
      %104 = arith.divf %100, %101 : vector<8x1xf32>
      %cst_72 = arith.constant 0x7FC00000 : f32
      %105 = vector.broadcast %cst_72 : f32 to vector<8x1xf32>
      %106 = arith.select %103, %104, %105 : vector<8x1xi1>, vector<8x1xf32>
      %c0_73 = arith.constant 0 : index
      %c0_74 = arith.constant 0 : index
      %107 = vector.load %arg13[%c0_73, %c0_74] : memref<8x1xf32, #tpu.memory_space<vmem>>, vector<8x1xf32>
      %c0_75 = arith.constant 0 : index
      %c0_76 = arith.constant 0 : index
      %108 = vector.load %arg14[%c0_75, %c0_76] : memref<8x1xf32, #tpu.memory_space<vmem>>, vector<8x1xf32>
      %cst_77 = arith.constant 0.000000e+00 : f32
      %109 = vector.broadcast %cst_77 : f32 to vector<8x1xf32>
      %110 = arith.cmpf ogt, %108, %109 : vector<8x1xf32>
      %111 = arith.divf %107, %108 : vector<8x1xf32>
      %cst_78 = arith.constant 0x7FC00000 : f32
      %112 = vector.broadcast %cst_78 : f32 to vector<8x1xf32>
      %113 = arith.select %110, %111, %112 : vector<8x1xi1>, vector<8x1xf32>
      %114 = arith.cmpf one, %92, %92 : vector<8x1xf32>
      %115 = arith.cmpf one, %99, %99 : vector<8x1xf32>
      %116 = arith.andi %114, %115 : vector<8x1xi1>
      %117 = arith.addf %92, %99 : vector<8x1xf32>
      %cst_79 = arith.constant 5.000000e-01 : f32
      %118 = vector.broadcast %cst_79 : f32 to vector<8x1xf32>
      %119 = arith.mulf %118, %117 : vector<8x1xf32>
      %120 = arith.select %115, %92, %119 : vector<8x1xi1>, vector<8x1xf32>
      %121 = arith.select %114, %99, %120 : vector<8x1xi1>, vector<8x1xf32>
      %cst_80 = arith.constant 0x7FC00000 : f32
      %122 = vector.broadcast %cst_80 : f32 to vector<8x1xf32>
      %123 = arith.select %116, %122, %121 : vector<8x1xi1>, vector<8x1xf32>
      %124 = arith.cmpf one, %123, %123 : vector<8x1xf32>
      %cst_81 = arith.constant dense<true> : vector<8x1xi1>
      %125 = arith.xori %124, %cst_81 : vector<8x1xi1>
      %126 = arith.extui %125 : vector<8x1xi1> to vector<8x1xi32>
      %127 = arith.sitofp %126 : vector<8x1xi32> to vector<8x1xf32>
      %128 = vector.shape_cast %127 : vector<8x1xf32> to vector<1x8x1xf32>
      %cst_82 = arith.constant dense<0.000000e+00> : vector<1xf32>
      %129 = vector.multi_reduction <add>, %128, %cst_82 [1, 2] : vector<1x8x1xf32> to vector<1xf32>
      %130 = vector.shape_cast %129 : vector<1xf32> to vector<1x1x1xf32>
      %131 = vector.extract %130[0, 0, 0] : f32 from vector<1x1x1xf32>
      %132 = vector.broadcast %131 : f32 to vector<1x1xf32>
      %cst_83 = arith.constant 0.000000e+00 : f32
      %133 = vector.broadcast %cst_83 : f32 to vector<8x1xf32>
      %134 = arith.select %125, %123, %133 : vector<8x1xi1>, vector<8x1xf32>
      %135 = vector.shape_cast %134 : vector<8x1xf32> to vector<1x8x1xf32>
      %cst_84 = arith.constant dense<0.000000e+00> : vector<1xf32>
      %136 = vector.multi_reduction <add>, %135, %cst_84 [1, 2] : vector<1x8x1xf32> to vector<1xf32>
      %137 = vector.shape_cast %136 : vector<1xf32> to vector<1x1x1xf32>
      %138 = vector.extract %137[0, 0, 0] : f32 from vector<1x1x1xf32>
      %139 = vector.broadcast %138 : f32 to vector<1x1xf32>
      %cst_85 = arith.constant 0.000000e+00 : f32
      %140 = vector.broadcast %cst_85 : f32 to vector<1x1xf32>
      %141 = arith.cmpf ogt, %132, %140 : vector<1x1xf32>
      %142 = arith.divf %139, %132 : vector<1x1xf32>
      %cst_86 = arith.constant 0x7FC00000 : f32
      %143 = vector.broadcast %cst_86 : f32 to vector<1x1xf32>
      %144 = arith.select %141, %142, %143 : vector<1x1xi1>, vector<1x1xf32>
      %c0_87 = arith.constant 0 : index
      %c0_88 = arith.constant 0 : index
      %145 = vector.load %arg3[%c0_87, %c0_88] : memref<1x1xf32, #tpu.memory_space<vmem>>, vector<1x1xf32>
      tpu.vector_store %arg3[%c0_87, %c0_88], %144 {strides = array<i32>} : memref<1x1xf32, #tpu.memory_space<vmem>>, vector<1x1xf32>,
      %146 = arith.cmpf one, %99, %99 : vector<8x1xf32>
      %cst_89 = arith.constant dense<true> : vector<8x1xi1>
      %147 = arith.xori %146, %cst_89 : vector<8x1xi1>
      %148 = arith.extui %147 : vector<8x1xi1> to vector<8x1xi32>
      %149 = arith.sitofp %148 : vector<8x1xi32> to vector<8x1xf32>
      %150 = vector.shape_cast %149 : vector<8x1xf32> to vector<1x8x1xf32>
      %cst_90 = arith.constant dense<0.000000e+00> : vector<1xf32>
      %151 = vector.multi_reduction <add>, %150, %cst_90 [1, 2] : vector<1x8x1xf32> to vector<1xf32>
      %152 = vector.shape_cast %151 : vector<1xf32> to vector<1x1x1xf32>
      %153 = vector.extract %152[0, 0, 0] : f32 from vector<1x1x1xf32>
      %154 = vector.broadcast %153 : f32 to vector<1x1xf32>
      %cst_91 = arith.constant 0.000000e+00 : f32
      %155 = vector.broadcast %cst_91 : f32 to vector<8x1xf32>
      %156 = arith.select %147, %99, %155 : vector<8x1xi1>, vector<8x1xf32>
      %157 = vector.shape_cast %156 : vector<8x1xf32> to vector<1x8x1xf32>
      %cst_92 = arith.constant dense<0.000000e+00> : vector<1xf32>
      %158 = vector.multi_reduction <add>, %157, %cst_92 [1, 2] : vector<1x8x1xf32> to vector<1xf32>
      %159 = vector.shape_cast %158 : vector<1xf32> to vector<1x1x1xf32>
      %160 = vector.extract %159[0, 0, 0] : f32 from vector<1x1x1xf32>
      %161 = vector.broadcast %160 : f32 to vector<1x1xf32>
      %cst_93 = arith.constant 0.000000e+00 : f32
      %162 = vector.broadcast %cst_93 : f32 to vector<1x1xf32>
      %163 = arith.cmpf ogt, %154, %162 : vector<1x1xf32>
      %164 = arith.divf %161, %154 : vector<1x1xf32>
      %cst_94 = arith.constant 0x7FC00000 : f32
      %165 = vector.broadcast %cst_94 : f32 to vector<1x1xf32>
      %166 = arith.select %163, %164, %165 : vector<1x1xi1>, vector<1x1xf32>
      %c0_95 = arith.constant 0 : index
      %c0_96 = arith.constant 0 : index
      %167 = vector.load %arg4[%c0_95, %c0_96] : memref<1x1xf32, #tpu.memory_space<vmem>>, vector<1x1xf32>
      tpu.vector_store %arg4[%c0_95, %c0_96], %166 {strides = array<i32>} : memref<1x1xf32, #tpu.memory_space<vmem>>, vector<1x1xf32>,
      %168 = arith.cmpf one, %106, %106 : vector<8x1xf32>
      %cst_97 = arith.constant dense<true> : vector<8x1xi1>
      %169 = arith.xori %168, %cst_97 : vector<8x1xi1>
      %170 = arith.extui %169 : vector<8x1xi1> to vector<8x1xi32>
      %171 = arith.sitofp %170 : vector<8x1xi32> to vector<8x1xf32>
      %172 = vector.shape_cast %171 : vector<8x1xf32> to vector<1x8x1xf32>
      %cst_98 = arith.constant dense<0.000000e+00> : vector<1xf32>
      %173 = vector.multi_reduction <add>, %172, %cst_98 [1, 2] : vector<1x8x1xf32> to vector<1xf32>
      %174 = vector.shape_cast %173 : vector<1xf32> to vector<1x1x1xf32>
      %175 = vector.extract %174[0, 0, 0] : f32 from vector<1x1x1xf32>
      %176 = vector.broadcast %175 : f32 to vector<1x1xf32>
      %cst_99 = arith.constant 0.000000e+00 : f32
      %177 = vector.broadcast %cst_99 : f32 to vector<8x1xf32>
      %178 = arith.select %169, %106, %177 : vector<8x1xi1>, vector<8x1xf32>
      %179 = vector.shape_cast %178 : vector<8x1xf32> to vector<1x8x1xf32>
      %cst_100 = arith.constant dense<0.000000e+00> : vector<1xf32>
      %180 = vector.multi_reduction <add>, %179, %cst_100 [1, 2] : vector<1x8x1xf32> to vector<1xf32>
      %181 = vector.shape_cast %180 : vector<1xf32> to vector<1x1x1xf32>
      %182 = vector.extract %181[0, 0, 0] : f32 from vector<1x1x1xf32>
      %183 = vector.broadcast %182 : f32 to vector<1x1xf32>
      %cst_101 = arith.constant 0.000000e+00 : f32
      %184 = vector.broadcast %cst_101 : f32 to vector<1x1xf32>
      %185 = arith.cmpf ogt, %176, %184 : vector<1x1xf32>
      %186 = arith.divf %183, %176 : vector<1x1xf32>
      %cst_102 = arith.constant 0x7FC00000 : f32
      %187 = vector.broadcast %cst_102 : f32 to vector<1x1xf32>
      %188 = arith.select %185, %186, %187 : vector<1x1xi1>, vector<1x1xf32>
      %c0_103 = arith.constant 0 : index
      %c0_104 = arith.constant 0 : index
      %189 = vector.load %arg5[%c0_103, %c0_104] : memref<1x1xf32, #tpu.memory_space<vmem>>, vector<1x1xf32>
      tpu.vector_store %arg5[%c0_103, %c0_104], %188 {strides = array<i32>} : memref<1x1xf32, #tpu.memory_space<vmem>>, vector<1x1xf32>,
      %190 = arith.cmpf one, %113, %113 : vector<8x1xf32>
      %cst_105 = arith.constant dense<true> : vector<8x1xi1>
      %191 = arith.xori %190, %cst_105 : vector<8x1xi1>
      %192 = arith.extui %191 : vector<8x1xi1> to vector<8x1xi32>
      %193 = arith.sitofp %192 : vector<8x1xi32> to vector<8x1xf32>
      %194 = vector.shape_cast %193 : vector<8x1xf32> to vector<1x8x1xf32>
      %cst_106 = arith.constant dense<0.000000e+00> : vector<1xf32>
      %195 = vector.multi_reduction <add>, %194, %cst_106 [1, 2] : vector<1x8x1xf32> to vector<1xf32>
      %196 = vector.shape_cast %195 : vector<1xf32> to vector<1x1x1xf32>
      %197 = vector.extract %196[0, 0, 0] : f32 from vector<1x1x1xf32>
      %198 = vector.broadcast %197 : f32 to vector<1x1xf32>
      %cst_107 = arith.constant 0.000000e+00 : f32
      %199 = vector.broadcast %cst_107 : f32 to vector<8x1xf32>
      %200 = arith.select %191, %113, %199 : vector<8x1xi1>, vector<8x1xf32>
      %201 = vector.shape_cast %200 : vector<8x1xf32> to vector<1x8x1xf32>
      %cst_108 = arith.constant dense<0.000000e+00> : vector<1xf32>
      %202 = vector.multi_reduction <add>, %201, %cst_108 [1, 2] : vector<1x8x1xf32> to vector<1xf32>
      %203 = vector.shape_cast %202 : vector<1xf32> to vector<1x1x1xf32>
      %204 = vector.extract %203[0, 0, 0] : f32 from vector<1x1x1xf32>
      %205 = vector.broadcast %204 : f32 to vector<1x1xf32>
      %cst_109 = arith.constant 0.000000e+00 : f32
      %206 = vector.broadcast %cst_109 : f32 to vector<1x1xf32>
      %207 = arith.cmpf ogt, %198, %206 : vector<1x1xf32>
      %208 = arith.divf %205, %198 : vector<1x1xf32>
      %cst_110 = arith.constant 0x7FC00000 : f32
      %209 = vector.broadcast %cst_110 : f32 to vector<1x1xf32>
      %210 = arith.select %207, %208, %209 : vector<1x1xi1>, vector<1x1xf32>
      %c0_111 = arith.constant 0 : index
      %c0_112 = arith.constant 0 : index
      %211 = vector.load %arg6[%c0_111, %c0_112] : memref<1x1xf32, #tpu.memory_space<vmem>>, vector<1x1xf32>
      tpu.vector_store %arg6[%c0_111, %c0_112], %210 {strides = array<i32>} : memref<1x1xf32, #tpu.memory_space<vmem>>, vector<1x1xf32>,
    } else {
    }
    return
  }
  func.func @transform_0(%arg0: i32) -> (i32, i32) {
    %c0_i32 = arith.constant 0 : i32
    %c0_i32_0 = arith.constant 0 : i32
    return %c0_i32, %arg0 : i32, i32
  }
  func.func @transform_1(%arg0: i32) -> (i32, i32) {
    %c0_i32 = arith.constant 0 : i32
    %c0_i32_0 = arith.constant 0 : i32
    return %c0_i32, %arg0 : i32, i32
  }
  func.func @transform_2(%arg0: i32) -> (i32, i32) {
    %c0_i32 = arith.constant 0 : i32
    %c0_i32_0 = arith.constant 0 : i32
    %c0_i32_1 = arith.constant 0 : i32
    return %c0_i32, %c0_i32_0 : i32, i32
  }
  func.func @transform_3(%arg0: i32) -> (i32, i32) {
    %c0_i32 = arith.constant 0 : i32
    %c0_i32_0 = arith.constant 0 : i32
    %c0_i32_1 = arith.constant 0 : i32
    return %c0_i32, %c0_i32_0 : i32, i32
  }
  func.func @transform_4(%arg0: i32) -> (i32, i32) {
    %c0_i32 = arith.constant 0 : i32
    %c0_i32_0 = arith.constant 0 : i32
    %c0_i32_1 = arith.constant 0 : i32
    return %c0_i32, %c0_i32_0 : i32, i32
  }
  func.func @transform_5(%arg0: i32) -> (i32, i32) {
    %c0_i32 = arith.constant 0 : i32
    %c0_i32_0 = arith.constant 0 : i32
    %c0_i32_1 = arith.constant 0 : i32
    return %c0_i32, %c0_i32_0 : i32, i32
  }
}

</mosaic_0001>

<llo_original>
// kernel: anticipation_mae.1
$region0: #{anticipation_mae.1}
  #allocation0 [shape = 'u32[]', space=smem, size = 0x4, offset = 0x4, fixed_abs, tag = 'smem constant byte address 0x4 - core index']
  #allocation1 [shape = 'u32[144,128]{1,0:T(1,128)}', space=vmem, size = 0x12000, scoped, tag = 'internal scratch']
  #allocation2 [shape = 'f32[8,1]{1,0:T(8,128)}', space=vmem, size = 0x1000, scoped, tag = 'scratch operand']
  #allocation3 [shape = 'f32[8,1]{1,0:T(8,128)}', space=vmem, size = 0x1000, scoped, tag = 'scratch operand']
  #allocation4 [shape = 'f32[8,1]{1,0:T(8,128)}', space=vmem, size = 0x1000, scoped, tag = 'scratch operand']
  #allocation5 [shape = 'f32[8,1]{1,0:T(8,128)}', space=vmem, size = 0x1000, scoped, tag = 'scratch operand']
  #allocation6 [shape = 'f32[8,1]{1,0:T(8,128)}', space=vmem, size = 0x1000, scoped, tag = 'scratch operand']
  #allocation7 [shape = 'f32[8,1]{1,0:T(8,128)}', space=vmem, size = 0x1000, scoped, tag = 'scratch operand']
  #allocation8 [shape = 'f32[8,1]{1,0:T(8,128)}', space=vmem, size = 0x1000, scoped, tag = 'scratch operand']
  #allocation9 [shape = 'f32[8,1]{1,0:T(8,128)}', space=vmem, size = 0x1000, scoped, tag = 'scratch operand']
  %s0 = inlined_call_operand.hbm [shape: f32[8,128], index: 0, kind: input, shape index: {}]
  %s1 = inlined_call_operand.hbm [shape: f32[8,128], index: 1, kind: input, shape index: {}]
  %s2 = inlined_call_operand.hbm [shape: f32[1,1], index: 2, kind: output, shape index: {0}]
  %s3 = inlined_call_operand.hbm [shape: f32[1,1], index: 3, kind: output, shape index: {1}]
  %s4 = inlined_call_operand.hbm [shape: f32[1,1], index: 4, kind: output, shape index: {2}]
  %s5 = inlined_call_operand.hbm [shape: f32[1,1], index: 5, kind: output, shape index: {3}]
  %6 = xla_tuple %s2, %s3, %s4, %s5
  %s7 = sld [smem:[#allocation0]]
  $region58: #{anticipation_mae.1} parent=0
    _
  %s9 = ssub.s32 1, %s7
  %s10 = scalar_select 0, %s9, %s7
  $region1: #{anticipation_mae.1} parent=0
    #allocation10 [shape = 'u8[4096]{0}', space=vmem, size = 0x1000, scoped, tag = 'input window, operand 0, single buffered']
    #allocation11 [shape = 's32[1]{0}', space=sflag, size = 0x4, scoped, tag = 'scoped memory for anticipation_mae.1']
    #allocation12 [shape = 's32[1]{0}', space=sflag, size = 0x4, scoped, tag = 'scoped memory for anticipation_mae.1']
    #allocation13 [shape = 'u8[4096]{0}', space=vmem, size = 0x1000, scoped, tag = 'input window, operand 1, single buffered']
    #allocation14 [shape = 's32[1]{0}', space=sflag, size = 0x4, scoped, tag = 'scoped memory for anticipation_mae.1']
    #allocation15 [shape = 'u8[512]{0}', space=vmem, size = 0x400, scoped, tag = 'output window, operand 0, single buffered']
    #allocation16 [shape = 'u8[512]{0}', space=vmem, size = 0x400, scoped, tag = 'output window, operand 1, single buffered']
    #allocation17 [shape = 's32[1]{0}', space=sflag, size = 0x4, scoped, tag = 'scoped memory for anticipation_mae.1']
    #allocation18 [shape = 'u8[512]{0}', space=vmem, size = 0x400, scoped, tag = 'output window, operand 2, single buffered']
    #allocation19 [shape = 'u8[512]{0}', space=vmem, size = 0x400, scoped, tag = 'output window, operand 3, single buffered']
    #allocation20 [shape = 's32[1]{0}', space=sflag, size = 0x4, scoped, tag = 'scoped memory for anticipation_mae.1']
    %11 = vsyncpa [#allocation11], 0
    %12 = vsyncpa [#allocation14], 0
    %13 = vsyncpa [#allocation12], 0
    %14 = vsyncpa [#allocation17], 0
    %15 = vsyncpa [#allocation20], 0
    // Predicated region
    $region2: #{anticipation_mae.1} parent=1 // pred_check
      _
    $region3: #{anticipation_mae.1} parent=1 // pred_check_branch
      %17 = sbr.rel (0) target = $region5
    $region4: #{anticipation_mae.1} parent=1 // pred_region
      %s19 = ssub.s32 128, 128
      %20 = vsyncadd [#allocation11], %s19
      %s22 = sshll.u32 [#allocation10], 4
      %s23 = int_to_ptr.vmem [resolvable:$true] %s22
      %25 = dma.hbm_to_vmem [thread:$0]  %s0, 128, %s23, [#allocation11]
    $region5: #{anticipation_mae.1} parent=1 // pred_fallthru
      _
    // Predicated region
    $region6: #{anticipation_mae.1} parent=1 // pred_check
      _
    $region7: #{anticipation_mae.1} parent=1 // pred_check_branch
      %27 = sbr.rel (0) target = $region9
    $region8: #{anticipation_mae.1} parent=1 // pred_region
      %s29 = ssub.s32 128, 128
      %30 = vsyncadd [#allocation14], %s29
      %s32 = sshll.u32 [#allocation13], 4
      %s33 = int_to_ptr.vmem [resolvable:$true] %s32
      %35 = dma.hbm_to_vmem [thread:$0]  %s1, 128, %s33, [#allocation14]
    $region9: #{anticipation_mae.1} parent=1 // pred_fallthru
      _
    // Predicated region
    $region10: #{anticipation_mae.1} parent=1 // pred_check
      _
    $region11: #{anticipation_mae.1} parent=1 // pred_check_branch
      %37 = sbr.rel (0) target = $region13
    $region12: #{anticipation_mae.1} parent=1 // pred_region
      %38 = dma.done [#allocation11], 128
    $region13: #{anticipation_mae.1} parent=1 // pred_fallthru
      _
    // Predicated region
    $region14: #{anticipation_mae.1} parent=1 // pred_check
      _
    $region15: #{anticipation_mae.1} parent=1 // pred_check_branch
      %40 = sbr.rel (0) target = $region17
    $region16: #{anticipation_mae.1} parent=1 // pred_region
      %41 = dma.done [#allocation14], 128
    $region17: #{anticipation_mae.1} parent=1 // pred_fallthru
      _
    %p42 = scmp.eq.s32.totalorder 0, 0
    // Predicated region
    $region18: #{anticipation_mae.1} parent=1 // pred_check
      %p43 = pneg %p42
    $region19: #{anticipation_mae.1} parent=1 // pred_check_branch
      %45 = sbr.rel (%p43) target = $region21
    $region20: #{anticipation_mae.1} parent=1 // pred_region
      %vm46 = vcmask 7168
      %47 = vst.msk [vmem:[#allocation2] sm:$0xff] %vm46, 0.0
      %48 = vst.msk [vmem:[#allocation3] sm:$0xff] %vm46, 0.0
      %49 = vst.msk [vmem:[#allocation4] sm:$0xff] %vm46, 0.0
      %50 = vst.msk [vmem:[#allocation5] sm:$0xff] %vm46, 0.0
      %51 = vst.msk [vmem:[#allocation6] sm:$0xff] %vm46, 0.0
      %52 = vst.msk [vmem:[#allocation7] sm:$0xff] %vm46, 0.0
      %53 = vst.msk [vmem:[#allocation8] sm:$0xff] %vm46, 0.0
      %54 = vst.msk [vmem:[#allocation9] sm:$0xff] %vm46, 0.0
    $region21: #{anticipation_mae.1} parent=1 // pred_fallthru
      _
    %v55 = vld [vmem:[#allocation10] sm:$0xff]
    %v56 = vld [vmem:[#allocation13] sm:$0xff]
    %vm57 = vcmp.gt.f32.partialorder %v56, 100.0
    %vm58 = vcmp.lt.f32.partialorder %v56, 0.0
    %vm59 = vmor %vm57, %vm58
    %v60 = vsel %vm59, 100.0, %v56
    %v61 = vsub.f32 %v55, %v60
    %v62 = vand.u32 2147483647, %v61
    %vm63 = vcmp.eq.f32.partialorder %v60, 100.0
    %vm64 = vcmp.lt.f32.partialorder %v60, 100.0
    %vm65 = vcmp.gt.f32.partialorder %v60, 0.0
    %vm66 = vmand %vm64, %vm65
    %vm67 = vcmp.lt.f32.partialorder %v55, 90.0
    %vm68 = vcmp.gt.f32.partialorder %v55, 10.0
    %vm69 = vmand %vm67, %vm68
    %vm70 = vcmp.lt.f32.partialorder %v60, 10.0
    %vm71 = vmand %vm70, %vm65
    %v72 = vsel %vm63, 1, 0
    %v73 = vcvt.s32.f32 %v72
    %v74 = vmul.f32 %v62, %v73
    %75 = vadd.xlane.f32.xlu0 %v74
    %v76 = vpop.xlane.xlu0 %75
    %77 = vadd.xlane.f32.xlu0 %v73
    %v78 = vpop.xlane.xlu0 %77
    %v79 = vsel %vm66, 1, 0
    %v80 = vcvt.s32.f32 %v79
    %v81 = vmul.f32 %v62, %v80
    %82 = vadd.xlane.f32.xlu0 %v81
    %v83 = vpop.xlane.xlu0 %82
    %84 = vadd.xlane.f32.xlu0 %v80
    %v85 = vpop.xlane.xlu0 %84
    %v86 = vsel %vm69, 1, 0
    %v87 = vcvt.s32.f32 %v86
    %v88 = vmul.f32 %v62, %v87
    %89 = vadd.xlane.f32.xlu0 %v88
    %v90 = vpop.xlane.xlu0 %89
    %91 = vadd.xlane.f32.xlu0 %v87
    %v92 = vpop.xlane.xlu0 %91
    %v93 = vsel %vm71, 1, 0
    %v94 = vcvt.s32.f32 %v93
    %v95 = vmul.f32 %v62, %v94
    %96 = vadd.xlane.f32.xlu0 %v95
    %v97 = vpop.xlane.xlu0 %96
    %98 = vadd.xlane.f32.xlu0 %v94
    %v99 = vpop.xlane.xlu0 %98
    %v100 = vld [vmem:[#allocation2] sm:$0xff]
    %v101 = vadd.f32 %v100, %v76
    %vm102 = vcmask 7168
    %103 = vst.msk [vmem:[#allocation2] sm:$0xff] %vm102, %v101
    %v104 = vld [vmem:[#allocation3] sm:$0xff]
    %v105 = vadd.f32 %v104, %v78
    %106 = vst.msk [vmem:[#allocation3] sm:$0xff] %vm102, %v105
    %v107 = vld [vmem:[#allocation4] sm:$0xff]
    %v108 = vadd.f32 %v107, %v83
    %109 = vst.msk [vmem:[#allocation4] sm:$0xff] %vm102, %v108
    %v110 = vld [vmem:[#allocation5] sm:$0xff]
    %v111 = vadd.f32 %v110, %v85
    %112 = vst.msk [vmem:[#allocation5] sm:$0xff] %vm102, %v111
    %v113 = vld [vmem:[#allocation6] sm:$0xff]
    %v114 = vadd.f32 %v113, %v90
    %115 = vst.msk [vmem:[#allocation6] sm:$0xff] %vm102, %v114
    %v116 = vld [vmem:[#allocation7] sm:$0xff]
    %v117 = vadd.f32 %v116, %v92
    %118 = vst.msk [vmem:[#allocation7] sm:$0xff] %vm102, %v117
    %v119 = vld [vmem:[#allocation8] sm:$0xff]
    %v120 = vadd.f32 %v119, %v97
    %121 = vst.msk [vmem:[#allocation8] sm:$0xff] %vm102, %v120
    %v122 = vld [vmem:[#allocation9] sm:$0xff]
    %v123 = vadd.f32 %v122, %v99
    %124 = vst.msk [vmem:[#allocation9] sm:$0xff] %vm102, %v123
    // Predicated region
    $region22: #{anticipation_mae.1} parent=1 // pred_check
      %p125 = pneg %p42
    $region23: #{anticipation_mae.1} parent=1 // pred_check_branch
      %127 = sbr.rel (%p125) target = $region25
    $region24: #{anticipation_mae.1} parent=1 // pred_region
      %v128 = vld [vmem:[#allocation2] sm:$0xff]
      %v129 = vld [vmem:[#allocation3] sm:$0xff]
      %vm130 = vcmp.gt.f32.partialorder %v129, 0.0
      %v131 = vrcp.pop %v129
      %v132 = vmul.f32 %v128, %v131
      %v133 = vsel %vm130, %v132, nan
      %v134 = vld [vmem:[#allocation4] sm:$0xff]
      %v135 = vld [vmem:[#allocation5] sm:$0xff]
      %vm136 = vcmp.gt.f32.partialorder %v135, 0.0
      %v137 = vrcp.pop %v135
      %v138 = vmul.f32 %v134, %v137
      %v139 = vsel %vm136, %v138, nan
      %v140 = vld [vmem:[#allocation6] sm:$0xff]
      %v141 = vld [vmem:[#allocation7] sm:$0xff]
      %vm142 = vcmp.gt.f32.partialorder %v141, 0.0
      %v143 = vrcp.pop %v141
      %v144 = vmul.f32 %v140, %v143
      %v145 = vsel %vm142, %v144, nan
      %v146 = vld [vmem:[#allocation8] sm:$0xff]
      %v147 = vld [vmem:[#allocation9] sm:$0xff]
      %vm148 = vcmp.gt.f32.partialorder %v147, 0.0
      %v149 = vrcp.pop %v147
      %v150 = vmul.f32 %v146, %v149
      %v151 = vsel %vm148, %v150, nan
      %vm152 = vcmp.ne.f32.partialorder %v133, %v133
      %vm153 = vcmp.ne.f32.partialorder %v139, %v139
      %vm154 = vmand %vm152, %vm153
      %v155 = vadd.f32 %v133, %v139
      %v156 = vmul.f32 %v155, 0.5
      %v157 = vsel %vm153, %v133, %v156
      %v158 = vsel %vm152, %v139, %v157
      %v159 = vsel %vm154, nan, %v158
      %vm160 = vcmp.ne.f32.partialorder %v159, %v159
      %vm161 = vmxor %vm160, 1
      %v162 = vsel %vm161, 1, 0
      %v163 = vcvt.s32.f32 %v162
      %v164 = vsel %vm102, %v163, 0.0
      %165 = vadd.xlane.f32.xlu0 %v164
      %v166 = vpop.xlane.xlu0 %165
      %v167 = vrot.slane %v166, 4
      %v168 = vadd.f32 %v166, %v167
      %v169 = vrot.slane %v168, 2
      %v170 = vadd.f32 %v168, %v169
      %v171 = vrot.slane %v170, 1
      %v172 = vadd.f32 %v170, %v171
      %s173 = vtos %v172
      %v174 = vstv %s173
      %v175 = vsel %vm161, %v159, 0.0
      %v176 = vsel %vm102, %v175, 0.0
      %177 = vadd.xlane.f32.xlu0 %v176
      %v178 = vpop.xlane.xlu0 %177
      %v179 = vrot.slane %v178, 4
      %v180 = vadd.f32 %v178, %v179
      %v181 = vrot.slane %v180, 2
      %v182 = vadd.f32 %v180, %v181
      %v183 = vrot.slane %v182, 1
      %v184 = vadd.f32 %v182, %v183
      %s185 = vtos %v184
      %v186 = vstv %s185
      %vm187 = vcmp.gt.f32.partialorder %v174, 0.0
      %v188 = vrcp.pop %v174
      %v189 = vmul.f32 %v186, %v188
      %v190 = vsel %vm187, %v189, nan
      %vm191 = vcmask 0
      %192 = vst.msk [vmem:[#allocation15] sm:$0x1] %vm191, %v190
      %vm193 = vmxor %vm153, 1
      %v194 = vsel %vm193, 1, 0
      %v195 = vcvt.s32.f32 %v194
      %v196 = vsel %vm102, %v195, 0.0
      %197 = vadd.xlane.f32.xlu0 %v196
      %v198 = vpop.xlane.xlu0 %197
      %v199 = vrot.slane %v198, 4
      %v200 = vadd.f32 %v198, %v199
      %v201 = vrot.slane %v200, 2
      %v202 = vadd.f32 %v200, %v201
      %v203 = vrot.slane %v202, 1
      %v204 = vadd.f32 %v202, %v203
      %s205 = vtos %v204
      %v206 = vstv %s205
      %v207 = vsel %vm193, %v139, 0.0
      %v208 = vsel %vm102, %v207, 0.0
      %209 = vadd.xlane.f32.xlu0 %v208
      %v210 = vpop.xlane.xlu0 %209
      %v211 = vrot.slane %v210, 4
      %v212 = vadd.f32 %v210, %v211
      %v213 = vrot.slane %v212, 2
      %v214 = vadd.f32 %v212, %v213
      %v215 = vrot.slane %v214, 1
      %v216 = vadd.f32 %v214, %v215
      %s217 = vtos %v216
      %v218 = vstv %s217
      %vm219 = vcmp.gt.f32.partialorder %v206, 0.0
      %v220 = vrcp.pop %v206
      %v221 = vmul.f32 %v218, %v220
      %v222 = vsel %vm219, %v221, nan
      %223 = vst.msk [vmem:[#allocation16] sm:$0x1] %vm191, %v222
      %vm224 = vcmp.ne.f32.partialorder %v145, %v145
      %vm225 = vmxor %vm224, 1
      %v226 = vsel %vm225, 1, 0
      %v227 = vcvt.s32.f32 %v226
      %v228 = vsel %vm102, %v227, 0.0
      %229 = vadd.xlane.f32.xlu0 %v228
      %v230 = vpop.xlane.xlu0 %229
      %v231 = vrot.slane %v230, 4
      %v232 = vadd.f32 %v230, %v231
      %v233 = vrot.slane %v232, 2
      %v234 = vadd.f32 %v232, %v233
      %v235 = vrot.slane %v234, 1
      %v236 = vadd.f32 %v234, %v235
      %s237 = vtos %v236
      %v238 = vstv %s237
      %v239 = vsel %vm225, %v145, 0.0
      %v240 = vsel %vm102, %v239, 0.0
      %241 = vadd.xlane.f32.xlu0 %v240
      %v242 = vpop.xlane.xlu0 %241
      %v243 = vrot.slane %v242, 4
      %v244 = vadd.f32 %v242, %v243
      %v245 = vrot.slane %v244, 2
      %v246 = vadd.f32 %v244, %v245
      %v247 = vrot.slane %v246, 1
      %v248 = vadd.f32 %v246, %v247
      %s249 = vtos %v248
      %v250 = vstv %s249
      %vm251 = vcmp.gt.f32.partialorder %v238, 0.0
      %v252 = vrcp.pop %v238
      %v253 = vmul.f32 %v250, %v252
      %v254 = vsel %vm251, %v253, nan
      %255 = vst.msk [vmem:[#allocation18] sm:$0x1] %vm191, %v254
      %vm256 = vcmp.ne.f32.partialorder %v151, %v151
      %vm257 = vmxor %vm256, 1
      %v258 = vsel %vm257, 1, 0
      %v259 = vcvt.s32.f32 %v258
      %v260 = vsel %vm102, %v259, 0.0
      %261 = vadd.xlane.f32.xlu0 %v260
      %v262 = vpop.xlane.xlu0 %261
      %v263 = vrot.slane %v262, 4
      %v264 = vadd.f32 %v262, %v263
      %v265 = vrot.slane %v264, 2
      %v266 = vadd.f32 %v264, %v265
      %v267 = vrot.slane %v266, 1
      %v268 = vadd.f32 %v266, %v267
      %s269 = vtos %v268
      %v270 = vstv %s269
      %v271 = vsel %vm257, %v151, 0.0
      %v272 = vsel %vm102, %v271, 0.0
      %273 = vadd.xlane.f32.xlu0 %v272
      %v274 = vpop.xlane.xlu0 %273
      %v275 = vrot.slane %v274, 4
      %v276 = vadd.f32 %v274, %v275
      %v277 = vrot.slane %v276, 2
      %v278 = vadd.f32 %v276, %v277
      %v279 = vrot.slane %v278, 1
      %v280 = vadd.f32 %v278, %v279
      %s281 = vtos %v280
      %v282 = vstv %s281
      %vm283 = vcmp.gt.f32.partialorder %v270, 0.0
      %v284 = vrcp.pop %v270
      %v285 = vmul.f32 %v282, %v284
      %v286 = vsel %vm283, %v285, nan
      %287 = vst.msk [vmem:[#allocation19] sm:$0x1] %vm191, %v286
    $region25: #{anticipation_mae.1} parent=1 // pred_fallthru
      _
    // Predicated region
    $region26: #{anticipation_mae.1} parent=1 // pred_check
      _
    $region27: #{anticipation_mae.1} parent=1 // pred_check_branch
      %289 = sbr.rel (0) target = $region29
    $region28: #{anticipation_mae.1} parent=1 // pred_region
      %s291 = ssub.s32 16, 16
      %292 = vsyncadd [#allocation12], %s291
      %s294 = sshll.u32 [#allocation15], 4
      %s295 = int_to_ptr.vmem [resolvable:$true] %s294
      %297 = dma.vmem_to_hbm [thread:$0]  %s295, 16, %s2, [#allocation12]
    $region29: #{anticipation_mae.1} parent=1 // pred_fallthru
      _
    // Predicated region
    $region30: #{anticipation_mae.1} parent=1 // pred_check
      _
    $region31: #{anticipation_mae.1} parent=1 // pred_check_branch
      %299 = sbr.rel (0) target = $region33
    $region32: #{anticipation_mae.1} parent=1 // pred_region
      %s301 = ssub.s32 16, 16
      %302 = vsyncadd [#allocation17], %s301
      %s304 = sshll.u32 [#allocation16], 4
      %s305 = int_to_ptr.vmem [resolvable:$true] %s304
      %307 = dma.vmem_to_hbm [thread:$0]  %s305, 16, %s3, [#allocation17]
    $region33: #{anticipation_mae.1} parent=1 // pred_fallthru
      _
    // Predicated region
    $region34: #{anticipation_mae.1} parent=1 // pred_check
      _
    $region35: #{anticipation_mae.1} parent=1 // pred_check_branch
      %309 = sbr.rel (0) target = $region37
    $region36: #{anticipation_mae.1} parent=1 // pred_region
      %s311 = ssub.s32 16, 16
      %312 = vsyncadd [#allocation17], %s311
      %s314 = sshll.u32 [#allocation18], 4
      %s315 = int_to_ptr.vmem [resolvable:$true] %s314
      %317 = dma.vmem_to_hbm [thread:$0]  %s315, 16, %s4, [#allocation17]
    $region37: #{anticipation_mae.1} parent=1 // pred_fallthru
      _
    // Predicated region
    $region38: #{anticipation_mae.1} parent=1 // pred_check
      _
    $region39: #{anticipation_mae.1} parent=1 // pred_check_branch
      %319 = sbr.rel (0) target = $region41
    $region40: #{anticipation_mae.1} parent=1 // pred_region
      %s321 = ssub.s32 16, 16
      %322 = vsyncadd [#allocation20], %s321
      %s324 = sshll.u32 [#allocation19], 4
      %s325 = int_to_ptr.vmem [resolvable:$true] %s324
      %327 = dma.vmem_to_hbm [thread:$0]  %s325, 16, %s5, [#allocation20]
    $region41: #{anticipation_mae.1} parent=1 // pred_fallthru
      _
    // Predicated region
    $region42: #{anticipation_mae.1} parent=1 // pred_check
      _
    $region43: #{anticipation_mae.1} parent=1 // pred_check_branch
      %329 = sbr.rel (0) target = $region45
    $region44: #{anticipation_mae.1} parent=1 // pred_region
      %330 = dma.done [#allocation12], 16
    $region45: #{anticipation_mae.1} parent=1 // pred_fallthru
      _
    // Predicated region
    $region46: #{anticipation_mae.1} parent=1 // pred_check
      _
    $region47: #{anticipation_mae.1} parent=1 // pred_check_branch
      %332 = sbr.rel (0) target = $region49
    $region48: #{anticipation_mae.1} parent=1 // pred_region
      %333 = dma.done [#allocation17], 16
    $region49: #{anticipation_mae.1} parent=1 // pred_fallthru
      _
    // Predicated region
    $region50: #{anticipation_mae.1} parent=1 // pred_check
      _
    $region51: #{anticipation_mae.1} parent=1 // pred_check_branch
      %335 = sbr.rel (0) target = $region53
    $region52: #{anticipation_mae.1} parent=1 // pred_region
      %336 = dma.done [#allocation17], 16
    $region53: #{anticipation_mae.1} parent=1 // pred_fallthru
      _
    // Predicated region
    $region54: #{anticipation_mae.1} parent=1 // pred_check
      _
    $region55: #{anticipation_mae.1} parent=1 // pred_check_branch
      %338 = sbr.rel (0) target = $region57
    $region56: #{anticipation_mae.1} parent=1 // pred_region
      %339 = dma.done [#allocation20], 16
    $region57: #{anticipation_mae.1} parent=1 // pred_fallthru
      _
    %340 = vsyncpa [#allocation11], 1
    %341 = vsyncpa [#allocation14], 1
    %342 = vsyncpa [#allocation12], 1
    %343 = vsyncpa [#allocation17], 1
    %344 = vsyncpa [#allocation20], 1

</llo_original>
